<compile_context>
chip_gen: v5e
topology: v5e:2x2
jax: 0.10.0
libtpu: 0.0.40
codegen_flags: <defaults>
</compile_context>

<pallas_src>
import jax
import jax.numpy as jnp
from jax import lax
from jax.experimental import pallas as pl
from jax.experimental.pallas import tpu as pltpu

_LANE = 128


def _make_lstm_kernel(T, Bp, Hp, state_in_vmem, unroll):
    H4 = 4 * Hp

    def lstm_kernel(x_ref, wih_ref, whh_ref, b_ref,
                    h_out_ref, c_out_ref, xw_ref):
        # ---- hoisted input projection: one big matmul + one bias add -------
        # (T*Bp, E) @ (E, 4Hp) + (1, 4Hp) -> (T*Bp, 4Hp), written once to VMEM.
        xw_ref[...] = (
            jnp.dot(x_ref[...], wih_ref[...], preferred_element_type=jnp.float32)
            + b_ref[...].astype(jnp.float32)
        )

        whh = whh_ref[...]          # (Hp, 4Hp), resident for whole recurrence
        cdtype = whh.dtype          # f32 here; bf16 if bf16 weights are passed

        def cell_step(xw_t, h, c):
            gates = xw_t + jnp.dot(h.astype(cdtype), whh,
                                   preferred_element_type=jnp.float32)
            # Gates are lane-aligned (Hp % 128 == 0), so per-gate activation is
            # mask-free and does 4*Hp EUP elements/step (vs 8*Hp for the
            # where(tanh, sigmoid) trick, only worthwhile for unaligned gates).
            if_act = jax.nn.sigmoid(gates[:, :2 * Hp])   # i and f together
            i_g = if_act[:, :Hp]
            f_g = if_act[:, Hp:]
            g_g = jnp.tanh(gates[:, 2 * Hp:3 * Hp])
            o_g = jax.nn.sigmoid(gates[:, 3 * Hp:])
            c_new = f_g * c + i_g * g_g
            h_new = o_g * jnp.tanh(c_new)
            return h_new, c_new

        def load_xw(t):
            row = pl.multiple_of(t * Bp, Bp)             # sublane-aligned start
            return xw_ref[pl.ds(row, Bp), :]             # (Bp, 4Hp)

        if state_in_vmem:
            # Large Bp*Hp: keep h/c resident in the VMEM output refs and update
            # in place, avoiding vreg spill/refill of big fori_loop carries.
            h_out_ref[...] = jnp.zeros((Bp, Hp), jnp.float32)
            c_out_ref[...] = jnp.zeros((Bp, Hp), jnp.float32)

            def body(t, carry):
                h_new, c_new = cell_step(load_xw(t), h_out_ref[...],
                                         c_out_ref[...])
                h_out_ref[...] = h_new
                c_out_ref[...] = c_new
                return carry

            lax.fori_loop(0, T, body, 0, unroll=unroll)
        else:
            def body(t, carry):
                h, c = carry
                return cell_step(load_xw(t), h, c)

            h0 = jnp.zeros((Bp, Hp), jnp.float32)
            c0 = jnp.zeros((Bp, Hp), jnp.float32)
            h_fin, c_fin = lax.fori_loop(0, T, body, (h0, c0), unroll=unroll)
            h_out_ref[...] = h_fin
            c_out_ref[...] = c_fin

    return lstm_kernel


def lstm_encoder_pallas(x2d, w_ih_t, w_hh_t, bias, *, seq_len, batch_padded):
    """x2d: (T*Bp, E) time-major embedded sequence (batch already padded).
    w_ih_t: (E, 4Hp), w_hh_t: (Hp, 4Hp), bias: (1, 4Hp) — gate blocks padded
    to Hp (multiple of 128).  Returns (h, c) each (Bp, Hp), f32."""
    T, Bp = seq_len, batch_padded
    E = x2d.shape[1]
    H4 = w_ih_t.shape[1]
    Hp = H4 // 4
    assert Hp % _LANE == 0, "gate blocks must be lane-aligned (pad in wrapper)"

    # State placement: vreg carries for small state, VMEM-resident otherwise.
    state_bytes = 2 * Bp * Hp * 4
    state_in_vmem = state_bytes > (128 * 1024)       # half the 256 KiB vreg file
    unroll = True if T <= 16 else 4                  # partial unroll for long T

    # Resident-VMEM footprint (gridless => single copy of everything).
    w_isize = jnp.dtype(w_ih_t.dtype).itemsize
    footprint = (x2d.size * jnp.dtype(x2d.dtype).itemsize
                 + w_ih_t.size * w_isize
                 + w_hh_t.size * w_isize
                 + bias.size * jnp.dtype(bias.dtype).itemsize
                 + 2 * Bp * Hp * 4                   # outputs
                 + T * Bp * H4 * 4)                  # hoisted-projection scratch
    if footprint > (40 << 20):
        # TODO(synk): chunk T behind a pipelined 'arbitrary' grid axis with h/c
        # carried in VMEM scratch instead of the gridless all-resident design.
        raise NotImplementedError(
            "gridless LSTM kernel footprint (%d bytes) exceeds safe VMEM budget"
            % footprint)
    vmem_limit = min(max((footprint * 3) // 2 + (4 << 20), 16 << 20), 64 << 20)

    kernel = _make_lstm_kernel(T, Bp, Hp, state_in_vmem, unroll)
    vmem = pltpu.MemorySpace.VMEM

    h, c = pl.pallas_call(
        kernel,
        out_shape=(
            jax.ShapeDtypeStruct((Bp, Hp), jnp.float32),
            jax.ShapeDtypeStruct((Bp, Hp), jnp.float32),
        ),
        in_specs=[pl.BlockSpec(memory_space=vmem)] * 4,
        out_specs=(pl.BlockSpec(memory_space=vmem),
                   pl.BlockSpec(memory_space=vmem)),
        scratch_shapes=[pltpu.VMEM((T * Bp, H4), jnp.float32)],  # hoisted x@W_ih
        compiler_params=pltpu.CompilerParams(vmem_limit_bytes=int(vmem_limit)),
    )(x2d, w_ih_t, w_hh_t, bias)
    return h, c


def _pad_gate_blocks(arr, H, Hp):
    """Pad the last dim, laid out as 4 gate blocks [i|f|g|o] of width H, so each
    block becomes Hp columns (zero fill).  Zero padding is exact: padded gate
    lanes stay at sigmoid(0)/tanh(0) and never influence the real lanes."""
    if Hp == H:
        return arr
    lead = arr.shape[:-1]
    a = arr.reshape(*lead, 4, H)
    a = jnp.pad(a, [(0, 0)] * len(lead) + [(0, 0), (0, Hp - H)])
    return a.reshape(*lead, 4 * Hp)


def encoder_forward(input_seq, params):
    """input_seq: (B, T) int32 token ids (batch_first, like the PyTorch module).
    Returns (hidden, cell) each of shape (1, B, H) — same as nn.LSTM."""
    emb = params["embedding"]
    w_ih_t = params["w_ih_t"]        # (E, 4H)
    w_hh_t = params["w_hh_t"]        # (H, 4H)
    bias = params["bias"]            # (1, 4H)
    w_dtype = w_ih_t.dtype

    B, T = input_seq.shape
    E = emb.shape[1]
    H = w_hh_t.shape[0]
    Hp = -(-H // _LANE) * _LANE                      # lane-align hidden size

    # bf16 packs 16 rows per sublane -> pad batch to 16; f32 -> 8.
    sub = 16 if jnp.dtype(w_dtype).itemsize == 2 else 8
    Bp = max(sub, -(-B // sub) * sub)
    # TODO(synk): for throughput, batch many independent sentences into Bp
    # (>=128) so the per-step MXU M dimension is actually filled.

    # Lane-align the gate blocks of the weights / bias (done per call here;
    # in a real deployment this is a one-time parameter transform).
    w_ih_p = _pad_gate_blocks(w_ih_t, H, Hp)                       # (E, 4Hp)
    w_hh_p = _pad_gate_blocks(w_hh_t, H, Hp)                       # (H, 4Hp)
    if Hp != H:
        w_hh_p = jnp.pad(w_hh_p, ((0, Hp - H), (0, 0)))            # (Hp, 4Hp)
    bias_p = _pad_gate_blocks(bias.astype(jnp.float32), H, Hp)     # (1, 4Hp)

    # Time-major ids (tiny int transpose; avoids transposing a (B,T,E) tensor).
    ids_tb = jnp.transpose(input_seq)                              # (T, B)
    if Bp != B:
        ids_tb = jnp.pad(ids_tb, ((0, 0), (0, Bp - B)))            # pad uses token 0
    # Time-major gather + contiguous flatten to (T*Bp, E).
    x2d = emb[ids_tb].reshape(T * Bp, E).astype(w_dtype)

    h, c = lstm_encoder_pallas(x2d, w_ih_p, w_hh_p, bias_p,
                               seq_len=T, batch_padded=Bp)
    return h[None, :B, :H], c[None, :B, :H]


def reference_forward(input_seq, params):
    """Plain-JAX reference of nn.Embedding + nn.LSTM forward (sanity check)."""
    emb = params["embedding"]
    embedded = emb[input_seq].astype(jnp.float32)  # (B, T, E)
    B, T, _ = embedded.shape
    H = params["w_hh_t"].shape[0]
    h = jnp.zeros((B, H), jnp.float32)
    c = jnp.zeros((B, H), jnp.float32)
    w_ih_t = params["w_ih_t"].astype(jnp.float32)
    w_hh_t = params["w_hh_t"].astype(jnp.float32)
    for t in range(T):
        x = embedded[:, t, :]
        gates = x @ w_ih_t + h @ w_hh_t + params["bias"]
        i = jax.nn.sigmoid(gates[:, 0 * H:1 * H])
        f = jax.nn.sigmoid(gates[:, 1 * H:2 * H])
        g = jnp.tanh(gates[:, 2 * H:3 * H])
        o = jax.nn.sigmoid(gates[:, 3 * H:4 * H])
        c = f * c + i * g
        h = o * jnp.tanh(c)
    return h[None], c[None]


if __name__ == "__main__":
    # Module constants: sentence 'My name is ujjwal' -> vocab_size = 4, embed_size = 8
    vocab_size = 4
    embed_size = 8
    hidden_size = 32
    batch = 2
    seq_len = 4

    key = jax.random.PRNGKey(0)
    k_emb, k_wih, k_whh, k_bih, k_bhh, k_in = jax.random.split(key, 6)

    # Deterministic init matching PyTorch conventions:
    #   nn.Embedding: N(0, 1);  nn.LSTM: U(-1/sqrt(H), 1/sqrt(H))
    bound = 1.0 / jnp.sqrt(jnp.float32(hidden_size))
    embedding = jax.random.normal(k_emb, (vocab_size, embed_size), jnp.float32)
    w_ih = jax.random.uniform(k_wih, (4 * hidden_size, embed_size),
                              jnp.float32, -bound, bound)
    w_hh = jax.random.uniform(k_whh, (4 * hidden_size, hidden_size),
                              jnp.float32, -bound, bound)
    b_ih = jax.random.uniform(k_bih, (4 * hidden_size,), jnp.float32, -bound, bound)
    b_hh = jax.random.uniform(k_bhh, (4 * hidden_size,), jnp.float32, -bound, bound)

    params = {
        "embedding": embedding,
        # Weights pre-transposed so the kernel computes x @ W_ih^T / h @ W_hh^T
        # directly on the MXU.  Kept f32 here for exact agreement with the
        # reference; pass bf16 for larger H on v6e/v7x (the kernel casts h to
        # the weight dtype before the dot and accumulates in f32; the
        # atol=1e-5 check below is f32-only).
        "w_ih_t": w_ih.T,                         # (E, 4H)
        "w_hh_t": w_hh.T,                         # (H, 4H)
        "bias": (b_ih + b_hh)[None, :],           # (1, 4H)
    }

    # Input token ids (batch_first), like the PyTorch module's input_seq.
    input_seq = jax.random.randint(k_in, (batch, seq_len), 0, vocab_size, jnp.int32)

    hidden, cell = encoder_forward(input_seq, params)
    hidden = jax.block_until_ready(hidden)
    cell = jax.block_until_ready(cell)

    h_ref, c_ref = reference_forward(input_seq, params)
    assert hidden.shape == (1, batch, hidden_size)
    assert cell.shape == (1, batch, hidden_size)
    assert jnp.allclose(hidden, h_ref, atol=1e-5), "hidden mismatch"
    assert jnp.allclose(cell, c_ref, atol=1e-5), "cell mismatch"

    print("KERNEL_OK")
</pallas_src>

<mosaic_0001>
module attributes {stable_mosaic.version = 11 : i64} {
  func.func @lstm_kernel(%arg0: memref<32x8xf32, #tpu.memory_space<vmem>>, %arg1: memref<8x512xf32, #tpu.memory_space<vmem>>, %arg2: memref<128x512xf32, #tpu.memory_space<vmem>>, %arg3: memref<1x512xf32, #tpu.memory_space<vmem>>, %arg4: memref<8x128xf32, #tpu.memory_space<vmem>>, %arg5: memref<8x128xf32, #tpu.memory_space<vmem>>, %arg6: memref<32x512xf32, #tpu.memory_space<vmem>>) attributes {dimension_semantics = [], scalar_prefetch = 0 : i64, scratch_operands = 1 : i64, tpu.core_type = #tpu.core_type<tc>} {
    %c0 = arith.constant 0 : index
    %c0_0 = arith.constant 0 : index
    %0 = vector.load %arg0[%c0, %c0_0] : memref<32x8xf32, #tpu.memory_space<vmem>>, vector<32x8xf32>
    %c0_1 = arith.constant 0 : index
    %c0_2 = arith.constant 0 : index
    %1 = vector.load %arg1[%c0_1, %c0_2] : memref<8x512xf32, #tpu.memory_space<vmem>>, vector<8x512xf32>
    %cst = arith.constant dense<0.000000e+00> : vector<32x512xf32>
    %2 = tpu.matmul %0, %1, %cst {dimension_numbers = #tpu.dot_dimension_numbers<[1], [0], [0], [1], [0, 0, 1, 1], [], []>} : vector<32x8xf32>, vector<8x512xf32>, vector<32x512xf32> -> vector<32x512xf32>
    %c0_3 = arith.constant 0 : index
    %c0_4 = arith.constant 0 : index
    %3 = vector.load %arg3[%c0_3, %c0_4] : memref<1x512xf32, #tpu.memory_space<vmem>>, vector<1x512xf32>
    %4 = vector.broadcast %3 : vector<1x512xf32> to vector<32x512xf32>
    %5 = arith.addf %2, %4 : vector<32x512xf32>
    %c0_5 = arith.constant 0 : index
    %c0_6 = arith.constant 0 : index
    %6 = vector.load %arg6[%c0_5, %c0_6] : memref<32x512xf32, #tpu.memory_space<vmem>>, vector<32x512xf32>
    tpu.vector_store %arg6[%c0_5, %c0_6], %5 {strides = array<i32>} : memref<32x512xf32, #tpu.memory_space<vmem>>, vector<32x512xf32>,
    %c0_7 = arith.constant 0 : index
    %c0_8 = arith.constant 0 : index
    %7 = vector.load %arg2[%c0_7, %c0_8] : memref<128x512xf32, #tpu.memory_space<vmem>>, vector<128x512xf32>
    %cst_9 = arith.constant 0.000000e+00 : f32
    %8 = vector.broadcast %cst_9 : f32 to vector<8x128xf32>
    %cst_10 = arith.constant 0.000000e+00 : f32
    %9 = vector.broadcast %cst_10 : f32 to vector<8x128xf32>
    %c0_i32 = arith.constant 0 : i32
    %c8_i32 = arith.constant 8 : i32
    %10 = arith.muli %c0_i32, %c8_i32 : i32
    %11 = tpu.assume_multiple %10, 8 : i32
    %12 = arith.index_cast %11 : i32 to index
    %c0_11 = arith.constant 0 : index
    %13 = vector.load %arg6[%12, %c0_11] : memref<32x512xf32, #tpu.memory_space<vmem>>, vector<8x512xf32>
    %cst_12 = arith.constant dense<0.000000e+00> : vector<8x512xf32>
    %14 = tpu.matmul %8, %7, %cst_12 {dimension_numbers = #tpu.dot_dimension_numbers<[1], [0], [0], [1], [0, 0, 1, 1], [], []>} : vector<8x128xf32>, vector<128x512xf32>, vector<8x512xf32> -> vector<8x512xf32>
    %15 = arith.addf %13, %14 : vector<8x512xf32>
    %16 = vector.extract_strided_slice %15 {offsets = [0, 0], sizes = [8, 256], strides = [1, 1]} : vector<8x512xf32> to vector<8x256xf32>
    %17 = arith.negf %16 : vector<8x256xf32>
    %18 = math.exp %17 : vector<8x256xf32>
    %cst_13 = arith.constant 1.000000e+00 : f32
    %19 = vector.broadcast %cst_13 : f32 to vector<8x256xf32>
    %20 = arith.addf %19, %18 : vector<8x256xf32>
    %21 = arith.divf %19, %20 : vector<8x256xf32>
    %22 = vector.extract_strided_slice %21 {offsets = [0, 0], sizes = [8, 128], strides = [1, 1]} : vector<8x256xf32> to vector<8x128xf32>
    %23 = vector.extract_strided_slice %21 {offsets = [0, 128], sizes = [8, 128], strides = [1, 1]} : vector<8x256xf32> to vector<8x128xf32>
    %24 = vector.extract_strided_slice %15 {offsets = [0, 256], sizes = [8, 128], strides = [1, 1]} : vector<8x512xf32> to vector<8x128xf32>
    %25 = math.tanh %24 : vector<8x128xf32>
    %26 = vector.extract_strided_slice %15 {offsets = [0, 384], sizes = [8, 128], strides = [1, 1]} : vector<8x512xf32> to vector<8x128xf32>
    %27 = arith.negf %26 : vector<8x128xf32>
    %28 = math.exp %27 : vector<8x128xf32>
    %cst_14 = arith.constant 1.000000e+00 : f32
    %29 = vector.broadcast %cst_14 : f32 to vector<8x128xf32>
    %30 = arith.addf %29, %28 : vector<8x128xf32>
    %31 = arith.divf %29, %30 : vector<8x128xf32>
    %32 = arith.mulf %23, %9 : vector<8x128xf32>
    %33 = arith.mulf %22, %25 : vector<8x128xf32>
    %34 = arith.addf %32, %33 : vector<8x128xf32>
    %35 = math.tanh %34 : vector<8x128xf32>
    %36 = arith.mulf %31, %35 : vector<8x128xf32>
    %c1_i32 = arith.constant 1 : i32
    %c8_i32_15 = arith.constant 8 : i32
    %37 = arith.muli %c1_i32, %c8_i32_15 : i32
    %38 = tpu.assume_multiple %37, 8 : i32
    %39 = arith.index_cast %38 : i32 to index
    %c0_16 = arith.constant 0 : index
    %40 = vector.load %arg6[%39, %c0_16] : memref<32x512xf32, #tpu.memory_space<vmem>>, vector<8x512xf32>
    %cst_17 = arith.constant dense<0.000000e+00> : vector<8x512xf32>
    %41 = tpu.matmul %36, %7, %cst_17 {dimension_numbers = #tpu.dot_dimension_numbers<[1], [0], [0], [1], [0, 0, 1, 1], [], []>} : vector<8x128xf32>, vector<128x512xf32>, vector<8x512xf32> -> vector<8x512xf32>
    %42 = arith.addf %40, %41 : vector<8x512xf32>
    %43 = vector.extract_strided_slice %42 {offsets = [0, 0], sizes = [8, 256], strides = [1, 1]} : vector<8x512xf32> to vector<8x256xf32>
    %44 = arith.negf %43 : vector<8x256xf32>
    %45 = math.exp %44 : vector<8x256xf32>
    %cst_18 = arith.constant 1.000000e+00 : f32
    %46 = vector.broadcast %cst_18 : f32 to vector<8x256xf32>
    %47 = arith.addf %46, %45 : vector<8x256xf32>
    %48 = arith.divf %46, %47 : vector<8x256xf32>
    %49 = vector.extract_strided_slice %48 {offsets = [0, 0], sizes = [8, 128], strides = [1, 1]} : vector<8x256xf32> to vector<8x128xf32>
    %50 = vector.extract_strided_slice %48 {offsets = [0, 128], sizes = [8, 128], strides = [1, 1]} : vector<8x256xf32> to vector<8x128xf32>
    %51 = vector.extract_strided_slice %42 {offsets = [0, 256], sizes = [8, 128], strides = [1, 1]} : vector<8x512xf32> to vector<8x128xf32>
    %52 = math.tanh %51 : vector<8x128xf32>
    %53 = vector.extract_strided_slice %42 {offsets = [0, 384], sizes = [8, 128], strides = [1, 1]} : vector<8x512xf32> to vector<8x128xf32>
    %54 = arith.negf %53 : vector<8x128xf32>
    %55 = math.exp %54 : vector<8x128xf32>
    %cst_19 = arith.constant 1.000000e+00 : f32
    %56 = vector.broadcast %cst_19 : f32 to vector<8x128xf32>
    %57 = arith.addf %56, %55 : vector<8x128xf32>
    %58 = arith.divf %56, %57 : vector<8x128xf32>
    %59 = arith.mulf %50, %34 : vector<8x128xf32>
    %60 = arith.mulf %49, %52 : vector<8x128xf32>
    %61 = arith.addf %59, %60 : vector<8x128xf32>
    %62 = math.tanh %61 : vector<8x128xf32>
    %63 = arith.mulf %58, %62 : vector<8x128xf32>
    %c2_i32 = arith.constant 2 : i32
    %c8_i32_20 = arith.constant 8 : i32
    %64 = arith.muli %c2_i32, %c8_i32_20 : i32
    %65 = tpu.assume_multiple %64, 8 : i32
    %66 = arith.index_cast %65 : i32 to index
    %c0_21 = arith.constant 0 : index
    %67 = vector.load %arg6[%66, %c0_21] : memref<32x512xf32, #tpu.memory_space<vmem>>, vector<8x512xf32>
    %cst_22 = arith.constant dense<0.000000e+00> : vector<8x512xf32>
    %68 = tpu.matmul %63, %7, %cst_22 {dimension_numbers = #tpu.dot_dimension_numbers<[1], [0], [0], [1], [0, 0, 1, 1], [], []>} : vector<8x128xf32>, vector<128x512xf32>, vector<8x512xf32> -> vector<8x512xf32>
    %69 = arith.addf %67, %68 : vector<8x512xf32>
    %70 = vector.extract_strided_slice %69 {offsets = [0, 0], sizes = [8, 256], strides = [1, 1]} : vector<8x512xf32> to vector<8x256xf32>
    %71 = arith.negf %70 : vector<8x256xf32>
    %72 = math.exp %71 : vector<8x256xf32>
    %cst_23 = arith.constant 1.000000e+00 : f32
    %73 = vector.broadcast %cst_23 : f32 to vector<8x256xf32>
    %74 = arith.addf %73, %72 : vector<8x256xf32>
    %75 = arith.divf %73, %74 : vector<8x256xf32>
    %76 = vector.extract_strided_slice %75 {offsets = [0, 0], sizes = [8, 128], strides = [1, 1]} : vector<8x256xf32> to vector<8x128xf32>
    %77 = vector.extract_strided_slice %75 {offsets = [0, 128], sizes = [8, 128], strides = [1, 1]} : vector<8x256xf32> to vector<8x128xf32>
    %78 = vector.extract_strided_slice %69 {offsets = [0, 256], sizes = [8, 128], strides = [1, 1]} : vector<8x512xf32> to vector<8x128xf32>
    %79 = math.tanh %78 : vector<8x128xf32>
    %80 = vector.extract_strided_slice %69 {offsets = [0, 384], sizes = [8, 128], strides = [1, 1]} : vector<8x512xf32> to vector<8x128xf32>
    %81 = arith.negf %80 : vector<8x128xf32>
    %82 = math.exp %81 : vector<8x128xf32>
    %cst_24 = arith.constant 1.000000e+00 : f32
    %83 = vector.broadcast %cst_24 : f32 to vector<8x128xf32>
    %84 = arith.addf %83, %82 : vector<8x128xf32>
    %85 = arith.divf %83, %84 : vector<8x128xf32>
    %86 = arith.mulf %77, %61 : vector<8x128xf32>
    %87 = arith.mulf %76, %79 : vector<8x128xf32>
    %88 = arith.addf %86, %87 : vector<8x128xf32>
    %89 = math.tanh %88 : vector<8x128xf32>
    %90 = arith.mulf %85, %89 : vector<8x128xf32>
    %c3_i32 = arith.constant 3 : i32
    %c8_i32_25 = arith.constant 8 : i32
    %91 = arith.muli %c3_i32, %c8_i32_25 : i32
    %92 = tpu.assume_multiple %91, 8 : i32
    %93 = arith.index_cast %92 : i32 to index
    %c0_26 = arith.constant 0 : index
    %94 = vector.load %arg6[%93, %c0_26] : memref<32x512xf32, #tpu.memory_space<vmem>>, vector<8x512xf32>
    %cst_27 = arith.constant dense<0.000000e+00> : vector<8x512xf32>
    %95 = tpu.matmul %90, %7, %cst_27 {dimension_numbers = #tpu.dot_dimension_numbers<[1], [0], [0], [1], [0, 0, 1, 1], [], []>} : vector<8x128xf32>, vector<128x512xf32>, vector<8x512xf32> -> vector<8x512xf32>
    %96 = arith.addf %94, %95 : vector<8x512xf32>
    %97 = vector.extract_strided_slice %96 {offsets = [0, 0], sizes = [8, 256], strides = [1, 1]} : vector<8x512xf32> to vector<8x256xf32>
    %98 = arith.negf %97 : vector<8x256xf32>
    %99 = math.exp %98 : vector<8x256xf32>
    %cst_28 = arith.constant 1.000000e+00 : f32
    %100 = vector.broadcast %cst_28 : f32 to vector<8x256xf32>
    %101 = arith.addf %100, %99 : vector<8x256xf32>
    %102 = arith.divf %100, %101 : vector<8x256xf32>
    %103 = vector.extract_strided_slice %102 {offsets = [0, 0], sizes = [8, 128], strides = [1, 1]} : vector<8x256xf32> to vector<8x128xf32>
    %104 = vector.extract_strided_slice %102 {offsets = [0, 128], sizes = [8, 128], strides = [1, 1]} : vector<8x256xf32> to vector<8x128xf32>
    %105 = vector.extract_strided_slice %96 {offsets = [0, 256], sizes = [8, 128], strides = [1, 1]} : vector<8x512xf32> to vector<8x128xf32>
    %106 = math.tanh %105 : vector<8x128xf32>
    %107 = vector.extract_strided_slice %96 {offsets = [0, 384], sizes = [8, 128], strides = [1, 1]} : vector<8x512xf32> to vector<8x128xf32>
    %108 = arith.negf %107 : vector<8x128xf32>
    %109 = math.exp %108 : vector<8x128xf32>
    %cst_29 = arith.constant 1.000000e+00 : f32
    %110 = vector.broadcast %cst_29 : f32 to vector<8x128xf32>
    %111 = arith.addf %110, %109 : vector<8x128xf32>
    %112 = arith.divf %110, %111 : vector<8x128xf32>
    %113 = arith.mulf %104, %88 : vector<8x128xf32>
    %114 = arith.mulf %103, %106 : vector<8x128xf32>
    %115 = arith.addf %113, %114 : vector<8x128xf32>
    %116 = math.tanh %115 : vector<8x128xf32>
    %117 = arith.mulf %112, %116 : vector<8x128xf32>
    %c4_i32 = arith.constant 4 : i32
    %c0_30 = arith.constant 0 : index
    %c0_31 = arith.constant 0 : index
    %118 = vector.load %arg4[%c0_30, %c0_31] : memref<8x128xf32, #tpu.memory_space<vmem>>, vector<8x128xf32>
    tpu.vector_store %arg4[%c0_30, %c0_31], %117 {strides = array<i32>} : memref<8x128xf32, #tpu.memory_space<vmem>>, vector<8x128xf32>,
    %c0_32 = arith.constant 0 : index
    %c0_33 = arith.constant 0 : index
    %119 = vector.load %arg5[%c0_32, %c0_33] : memref<8x128xf32, #tpu.memory_space<vmem>>, vector<8x128xf32>
    tpu.vector_store %arg5[%c0_32, %c0_33], %115 {strides = array<i32>} : memref<8x128xf32, #tpu.memory_space<vmem>>, vector<8x128xf32>,
    return
  }
}

</mosaic_0001>

<llo_original>
// kernel: tpu_custom_call.1
$region0: #{tpu_custom_call.1}
  #allocation0 [shape = 'u32[]', space=smem, size = 0x4, offset = 0x4, fixed_abs, tag = 'smem constant byte address 0x4 - core index']
  #allocation1 [shape = 'u32[72,128]{1,0:T(1,128)}', space=vmem, size = 0x9000, scoped, tag = 'internal scratch']
  #allocation2 [shape = 'f32[32,512]{1,0:T(8,128)}', space=vmem, size = 0x10000, scoped, tag = 'scratch operand']
  %s0 = inlined_call_operand.vmem [shape: f32[32,8], index: 0, kind: input, shape index: {}]
  %s1 = inlined_call_operand.vmem [shape: f32[8,512], index: 1, kind: input, shape index: {}]
  %s2 = inlined_call_operand.hbm [shape: f32[128,512], index: 2, kind: input, shape index: {}]
  %s3 = inlined_call_operand.vmem [shape: f32[1,512], index: 3, kind: input, shape index: {}]
  %s4 = inlined_call_operand.hbm [shape: f32[8,128], index: 4, kind: output, shape index: {0}]
  %s5 = inlined_call_operand.hbm [shape: f32[8,128], index: 5, kind: output, shape index: {1}]
  %6 = xla_tuple %s4, %s5
  %s7 = sld [smem:[#allocation0]]
  $region38: #{tpu_custom_call.1} parent=0
    _
  %s9 = ssub.s32 1, %s7
  %s10 = scalar_select 0, %s9, %s7
  $region1: #{tpu_custom_call.1} parent=0
    #allocation3 [shape = 'u8[262144]{0}', space=vmem, size = 0x40000, scoped, tag = 'input window, operand 2, single buffered']
    #allocation4 [shape = 's32[1]{0}', space=sflag, size = 0x4, scoped, tag = 'scoped memory for tpu_custom_call.1']
    #allocation5 [shape = 's32[1]{0}', space=sflag, size = 0x4, scoped, tag = 'scoped memory for tpu_custom_call.1']
    #allocation6 [shape = 'u8[4096]{0}', space=vmem, size = 0x1000, scoped, tag = 'output window, operand 0, single buffered']
    #allocation7 [shape = 'u8[4096]{0}', space=vmem, size = 0x1000, scoped, tag = 'output window, operand 1, single buffered']
    #allocation8 [shape = 's32[1]{0}', space=sflag, size = 0x4, scoped, tag = 'scoped memory for tpu_custom_call.1']
    %11 = vsyncpa [#allocation4], 0
    %12 = vsyncpa [#allocation5], 0
    %13 = vsyncpa [#allocation8], 0
    // Predicated region
    $region2: #{tpu_custom_call.1} parent=1 // pred_check
      _
    $region3: #{tpu_custom_call.1} parent=1 // pred_check_branch
      %15 = sbr.rel (0) target = $region5
    $region4: #{tpu_custom_call.1} parent=1 // pred_region
      _
    $region5: #{tpu_custom_call.1} parent=1 // pred_fallthru
      _
    // Predicated region
    $region6: #{tpu_custom_call.1} parent=1 // pred_check
      _
    $region7: #{tpu_custom_call.1} parent=1 // pred_check_branch
      %17 = sbr.rel (0) target = $region9
    $region8: #{tpu_custom_call.1} parent=1 // pred_region
      _
    $region9: #{tpu_custom_call.1} parent=1 // pred_fallthru
      _
    // Predicated region
    $region10: #{tpu_custom_call.1} parent=1 // pred_check
      _
    $region11: #{tpu_custom_call.1} parent=1 // pred_check_branch
      %19 = sbr.rel (0) target = $region13
    $region12: #{tpu_custom_call.1} parent=1 // pred_region
      %21 = vsyncadd [#allocation4], 0
      %s22 = sshll.u32 %s2, 4
      %s23 = int_to_ptr.hbm [resolvable:$true] %s22
      %s24 = sshll.u32 [#allocation3], 4
      %s25 = int_to_ptr.vmem [resolvable:$true] %s24
      %30 = dma.hbm_to_vmem [thread:$0]  %s23, 8192, %s25, [#allocation4], 512, 512, 32
    $region13: #{tpu_custom_call.1} parent=1 // pred_fallthru
      _
    // Predicated region
    $region14: #{tpu_custom_call.1} parent=1 // pred_check
      _
    $region15: #{tpu_custom_call.1} parent=1 // pred_check_branch
      %32 = sbr.rel (0) target = $region17
    $region16: #{tpu_custom_call.1} parent=1 // pred_region
      _
    $region17: #{tpu_custom_call.1} parent=1 // pred_fallthru
      _
    // Predicated region
    $region18: #{tpu_custom_call.1} parent=1 // pred_check
      _
    $region19: #{tpu_custom_call.1} parent=1 // pred_check_branch
      %34 = sbr.rel (0) target = $region21
    $region20: #{tpu_custom_call.1} parent=1 // pred_region
      %36 = dma.done [#allocation4], 8192
    $region21: #{tpu_custom_call.1} parent=1 // pred_fallthru
      _
    %v37 = vld [vmem:[%s0] sm:$0xff]
    %v38 = vld [vmem:[%s0 + $0x8] sm:$0xff]
    %v39 = vld [vmem:[%s0 + $0x10] sm:$0xff]
    %v40 = vld [vmem:[%s0 + $0x18] sm:$0xff]
    %v41 = vld [vmem:[%s1] sm:$0xff]
    %v42 = vld [vmem:[%s1 + $0x8] sm:$0xff]
    %v43 = vld [vmem:[%s1 + $0x10] sm:$0xff]
    %v44 = vld [vmem:[%s1 + $0x18] sm:$0xff]
    %v45 = vld [vmem:[%s3] sm:$0xf]
    %v47 = vperm.slane %v45, 0
    %v48 = vperm.slane %v45, 1
    %v49 = vperm.slane %v45, 2
    %v50 = vperm.slane %v45, 3
    %vm55 = vcmask 64512
    %v57 = vsel %vm55, %v37, 0
    %v60 = vsel %vm55, %v38, 0
    %v63 = vsel %vm55, %v39, 0
    %v66 = vsel %vm55, %v40, 0
    %68 = vmatpush.msra.mxu0 0.0
    %69 = vmatpush.msra.mxu0 0.0
    %70 = vmatpush.msra.mxu0 0.0
    %71 = vmatpush.msra.mxu0 0.0
    %72 = vmatpush.msra.mxu0 0.0
    %73 = vmatpush.msra.mxu0 0.0
    %74 = vmatpush.msra.mxu0 0.0
    %75 = vmatpush.msra.mxu0 0.0
    %76 = vmatpush.msra.mxu0 0.0
    %77 = vmatpush.msra.mxu0 0.0
    %78 = vmatpush.msra.mxu0 0.0
    %79 = vmatpush.msra.mxu0 0.0
    %80 = vmatpush.msra.mxu0 0.0
    %81 = vmatpush.msra.mxu0 0.0
    %82 = vmatpush.msra.mxu0 0.0
    %83 = vmatpush.msra.mxu0 %v41
    %84 = vmatmul.f32.gmra.mxu0 %v57
    %v85 = vpop.f32.mrf.mxu0
    %v86 = vadd.f32 %v47, %v85
    %87 = vmatmul.f32.gmra.mxu0 %v60
    %v88 = vpop.f32.mrf.mxu0
    %v89 = vadd.f32 %v47, %v88
    %90 = vmatmul.f32.gmra.mxu0 %v63
    %v91 = vpop.f32.mrf.mxu0
    %v92 = vadd.f32 %v47, %v91
    %93 = vmatmul.f32.gmra.mxu0 %v66
    %v94 = vpop.f32.mrf.mxu0
    %v95 = vadd.f32 %v47, %v94
    %96 = vdwg.mxu0
    %97 = vmatpush.msra.mxu0 0.0
    %98 = vmatpush.msra.mxu0 0.0
    %99 = vmatpush.msra.mxu0 0.0
    %100 = vmatpush.msra.mxu0 0.0
    %101 = vmatpush.msra.mxu0 0.0
    %102 = vmatpush.msra.mxu0 0.0
    %103 = vmatpush.msra.mxu0 0.0
    %104 = vmatpush.msra.mxu0 0.0
    %105 = vmatpush.msra.mxu0 0.0
    %106 = vmatpush.msra.mxu0 0.0
    %107 = vmatpush.msra.mxu0 0.0
    %108 = vmatpush.msra.mxu0 0.0
    %109 = vmatpush.msra.mxu0 0.0
    %110 = vmatpush.msra.mxu0 0.0
    %111 = vmatpush.msra.mxu0 0.0
    %112 = vmatpush.msra.mxu0 %v42
    %113 = vmatmul.f32.gmra.mxu0 %v57
    %v114 = vpop.f32.mrf.mxu0
    %v115 = vadd.f32 %v48, %v114
    %116 = vmatmul.f32.gmra.mxu0 %v60
    %v117 = vpop.f32.mrf.mxu0
    %v118 = vadd.f32 %v48, %v117
    %119 = vmatmul.f32.gmra.mxu0 %v63
    %v120 = vpop.f32.mrf.mxu0
    %v121 = vadd.f32 %v48, %v120
    %122 = vmatmul.f32.gmra.mxu0 %v66
    %v123 = vpop.f32.mrf.mxu0
    %v124 = vadd.f32 %v48, %v123
    %125 = vdwg.mxu0
    %126 = vmatpush.msra.mxu0 0.0
    %127 = vmatpush.msra.mxu0 0.0
    %128 = vmatpush.msra.mxu0 0.0
    %129 = vmatpush.msra.mxu0 0.0
    %130 = vmatpush.msra.mxu0 0.0
    %131 = vmatpush.msra.mxu0 0.0
    %132 = vmatpush.msra.mxu0 0.0
    %133 = vmatpush.msra.mxu0 0.0
    %134 = vmatpush.msra.mxu0 0.0
    %135 = vmatpush.msra.mxu0 0.0
    %136 = vmatpush.msra.mxu0 0.0
    %137 = vmatpush.msra.mxu0 0.0
    %138 = vmatpush.msra.mxu0 0.0
    %139 = vmatpush.msra.mxu0 0.0
    %140 = vmatpush.msra.mxu0 0.0
    %141 = vmatpush.msra.mxu0 %v43
    %142 = vmatmul.f32.gmra.mxu0 %v57
    %v143 = vpop.f32.mrf.mxu0
    %v144 = vadd.f32 %v49, %v143
    %145 = vmatmul.f32.gmra.mxu0 %v60
    %v146 = vpop.f32.mrf.mxu0
    %v147 = vadd.f32 %v49, %v146
    %148 = vmatmul.f32.gmra.mxu0 %v63
    %v149 = vpop.f32.mrf.mxu0
    %v150 = vadd.f32 %v49, %v149
    %151 = vmatmul.f32.gmra.mxu0 %v66
    %v152 = vpop.f32.mrf.mxu0
    %v153 = vadd.f32 %v49, %v152
    %154 = vdwg.mxu0
    %155 = vmatpush.msra.mxu0 0.0
    %156 = vmatpush.msra.mxu0 0.0
    %157 = vmatpush.msra.mxu0 0.0
    %158 = vmatpush.msra.mxu0 0.0
    %159 = vmatpush.msra.mxu0 0.0
    %160 = vmatpush.msra.mxu0 0.0
    %161 = vmatpush.msra.mxu0 0.0
    %162 = vmatpush.msra.mxu0 0.0
    %163 = vmatpush.msra.mxu0 0.0
    %164 = vmatpush.msra.mxu0 0.0
    %165 = vmatpush.msra.mxu0 0.0
    %166 = vmatpush.msra.mxu0 0.0
    %167 = vmatpush.msra.mxu0 0.0
    %168 = vmatpush.msra.mxu0 0.0
    %169 = vmatpush.msra.mxu0 0.0
    %170 = vmatpush.msra.mxu0 %v44
    %171 = vmatmul.f32.gmra.mxu0 %v57
    %v172 = vpop.f32.mrf.mxu0
    %v173 = vadd.f32 %v50, %v172
    %174 = vmatmul.f32.gmra.mxu0 %v60
    %v175 = vpop.f32.mrf.mxu0
    %v176 = vadd.f32 %v50, %v175
    %177 = vmatmul.f32.gmra.mxu0 %v63
    %v178 = vpop.f32.mrf.mxu0
    %v179 = vadd.f32 %v50, %v178
    %180 = vmatmul.f32.gmra.mxu0 %v66
    %v181 = vpop.f32.mrf.mxu0
    %v182 = vadd.f32 %v50, %v181
    %183 = vdwg.mxu0
    %184 = vst [vmem:[#allocation2] sm:$0xff] %v86
    %185 = vst [vmem:[#allocation2 + $0x8] sm:$0xff] %v115
    %186 = vst [vmem:[#allocation2 + $0x10] sm:$0xff] %v144
    %187 = vst [vmem:[#allocation2 + $0x18] sm:$0xff] %v173
    %188 = vst [vmem:[#allocation2 + $0x20] sm:$0xff] %v89
    %189 = vst [vmem:[#allocation2 + $0x28] sm:$0xff] %v118
    %190 = vst [vmem:[#allocation2 + $0x30] sm:$0xff] %v147
    %191 = vst [vmem:[#allocation2 + $0x38] sm:$0xff] %v176
    %192 = vst [vmem:[#allocation2 + $0x40] sm:$0xff] %v92
    %193 = vst [vmem:[#allocation2 + $0x48] sm:$0xff] %v121
    %194 = vst [vmem:[#allocation2 + $0x50] sm:$0xff] %v150
    %195 = vst [vmem:[#allocation2 + $0x58] sm:$0xff] %v179
    %196 = vst [vmem:[#allocation2 + $0x60] sm:$0xff] %v95
    %197 = vst [vmem:[#allocation2 + $0x68] sm:$0xff] %v124
    %198 = vst [vmem:[#allocation2 + $0x70] sm:$0xff] %v153
    %199 = vst [vmem:[#allocation2 + $0x78] sm:$0xff] %v182
    %v200 = vld [vmem:[#allocation3] sm:$0xff]
    %v201 = vld [vmem:[#allocation3 + $0x8] sm:$0xff]
    %v202 = vld [vmem:[#allocation3 + $0x10] sm:$0xff]
    %v203 = vld [vmem:[#allocation3 + $0x18] sm:$0xff]
    %v204 = vld [vmem:[#allocation3 + $0x20] sm:$0xff]
    %v205 = vld [vmem:[#allocation3 + $0x28] sm:$0xff]
    %v206 = vld [vmem:[#allocation3 + $0x30] sm:$0xff]
    %v207 = vld [vmem:[#allocation3 + $0x38] sm:$0xff]
    %v208 = vld [vmem:[#allocation3 + $0x40] sm:$0xff]
    %v209 = vld [vmem:[#allocation3 + $0x48] sm:$0xff]
    %v210 = vld [vmem:[#allocation3 + $0x50] sm:$0xff]
    %v211 = vld [vmem:[#allocation3 + $0x58] sm:$0xff]
    %v212 = vld [vmem:[#allocation3 + $0x60] sm:$0xff]
    %v213 = vld [vmem:[#allocation3 + $0x68] sm:$0xff]
    %v214 = vld [vmem:[#allocation3 + $0x70] sm:$0xff]
    %v215 = vld [vmem:[#allocation3 + $0x78] sm:$0xff]
    %v216 = vld [vmem:[#allocation3 + $0x80] sm:$0xff]
    %v217 = vld [vmem:[#allocation3 + $0x88] sm:$0xff]
    %v218 = vld [vmem:[#allocation3 + $0x90] sm:$0xff]
    %v219 = vld [vmem:[#allocation3 + $0x98] sm:$0xff]
    %v220 = vld [vmem:[#allocation3 + $0xa0] sm:$0xff]
    %v221 = vld [vmem:[#allocation3 + $0xa8] sm:$0xff]
    %v222 = vld [vmem:[#allocation3 + $0xb0] sm:$0xff]
    %v223 = vld [vmem:[#allocation3 + $0xb8] sm:$0xff]
    %v224 = vld [vmem:[#allocation3 + $0xc0] sm:$0xff]
    %v225 = vld [vmem:[#allocation3 + $0xc8] sm:$0xff]
    %v226 = vld [vmem:[#allocation3 + $0xd0] sm:$0xff]
    %v227 = vld [vmem:[#allocation3 + $0xd8] sm:$0xff]
    %v228 = vld [vmem:[#allocation3 + $0xe0] sm:$0xff]
    %v229 = vld [vmem:[#allocation3 + $0xe8] sm:$0xff]
    %v230 = vld [vmem:[#allocation3 + $0xf0] sm:$0xff]
    %v231 = vld [vmem:[#allocation3 + $0xf8] sm:$0xff]
    %v232 = vld [vmem:[#allocation3 + $0x100] sm:$0xff]
    %v233 = vld [vmem:[#allocation3 + $0x108] sm:$0xff]
    %v234 = vld [vmem:[#allocation3 + $0x110] sm:$0xff]
    %v235 = vld [vmem:[#allocation3 + $0x118] sm:$0xff]
    %v236 = vld [vmem:[#allocation3 + $0x120] sm:$0xff]
    %v237 = vld [vmem:[#allocation3 + $0x128] sm:$0xff]
    %v238 = vld [vmem:[#allocation3 + $0x130] sm:$0xff]
    %v239 = vld [vmem:[#allocation3 + $0x138] sm:$0xff]
    %v240 = vld [vmem:[#allocation3 + $0x140] sm:$0xff]
    %v241 = vld [vmem:[#allocation3 + $0x148] sm:$0xff]
    %v242 = vld [vmem:[#allocation3 + $0x150] sm:$0xff]
    %v243 = vld [vmem:[#allocation3 + $0x158] sm:$0xff]
    %v244 = vld [vmem:[#allocation3 + $0x160] sm:$0xff]
    %v245 = vld [vmem:[#allocation3 + $0x168] sm:$0xff]
    %v246 = vld [vmem:[#allocation3 + $0x170] sm:$0xff]
    %v247 = vld [vmem:[#allocation3 + $0x178] sm:$0xff]
    %v248 = vld [vmem:[#allocation3 + $0x180] sm:$0xff]
    %v249 = vld [vmem:[#allocation3 + $0x188] sm:$0xff]
    %v250 = vld [vmem:[#allocation3 + $0x190] sm:$0xff]
    %v251 = vld [vmem:[#allocation3 + $0x198] sm:$0xff]
    %v252 = vld [vmem:[#allocation3 + $0x1a0] sm:$0xff]
    %v253 = vld [vmem:[#allocation3 + $0x1a8] sm:$0xff]
    %v254 = vld [vmem:[#allocation3 + $0x1b0] sm:$0xff]
    %v255 = vld [vmem:[#allocation3 + $0x1b8] sm:$0xff]
    %v256 = vld [vmem:[#allocation3 + $0x1c0] sm:$0xff]
    %v257 = vld [vmem:[#allocation3 + $0x1c8] sm:$0xff]
    %v258 = vld [vmem:[#allocation3 + $0x1d0] sm:$0xff]
    %v259 = vld [vmem:[#allocation3 + $0x1d8] sm:$0xff]
    %v260 = vld [vmem:[#allocation3 + $0x1e0] sm:$0xff]
    %v261 = vld [vmem:[#allocation3 + $0x1e8] sm:$0xff]
    %v262 = vld [vmem:[#allocation3 + $0x1f0] sm:$0xff]
    %v263 = vld [vmem:[#allocation3 + $0x1f8] sm:$0xff]
    %s264 = smul.u32 0, 4
    %s265 = smul.addr %s264, 8
    %s266 = scalar_lea.vmem [#allocation2], %s265
    %v267 = vld [vmem:[%s266] sm:$0xff]
    %v268 = vld [vmem:[%s266 + $0x8] sm:$0xff]
    %v269 = vld [vmem:[%s266 + $0x10] sm:$0xff]
    %v270 = vld [vmem:[%s266 + $0x18] sm:$0xff]
    %271 = vmatpush.msra.mxu0 %v260
    %272 = vmatpush.msra.mxu0 %v256
    %273 = vmatpush.msra.mxu0 %v252
    %274 = vmatpush.msra.mxu0 %v248
    %275 = vmatpush.msra.mxu0 %v244
    %276 = vmatpush.msra.mxu0 %v240
    %277 = vmatpush.msra.mxu0 %v236
    %278 = vmatpush.msra.mxu0 %v232
    %279 = vmatpush.msra.mxu0 %v228
    %280 = vmatpush.msra.mxu0 %v224
    %281 = vmatpush.msra.mxu0 %v220
    %282 = vmatpush.msra.mxu0 %v216
    %283 = vmatpush.msra.mxu0 %v212
    %284 = vmatpush.msra.mxu0 %v208
    %285 = vmatpush.msra.mxu0 %v204
    %286 = vmatpush.msra.mxu0 %v200
    %287 = vmatmul.f32.gmra.mxu0 0.0
    %v288 = vpop.f32.mrf.mxu0
    %v289 = vadd.f32 0.0, %v288
    %290 = vdwg.mxu0
    %291 = vmatpush.msra.mxu0 %v261
    %292 = vmatpush.msra.mxu0 %v257
    %293 = vmatpush.msra.mxu0 %v253
    %294 = vmatpush.msra.mxu0 %v249
    %295 = vmatpush.msra.mxu0 %v245
    %296 = vmatpush.msra.mxu0 %v241
    %297 = vmatpush.msra.mxu0 %v237
    %298 = vmatpush.msra.mxu0 %v233
    %299 = vmatpush.msra.mxu0 %v229
    %300 = vmatpush.msra.mxu0 %v225
    %301 = vmatpush.msra.mxu0 %v221
    %302 = vmatpush.msra.mxu0 %v217
    %303 = vmatpush.msra.mxu0 %v213
    %304 = vmatpush.msra.mxu0 %v209
    %305 = vmatpush.msra.mxu0 %v205
    %306 = vmatpush.msra.mxu0 %v201
    %307 = vmatmul.f32.gmra.mxu0 0.0
    %v308 = vpop.f32.mrf.mxu0
    %v309 = vadd.f32 0.0, %v308
    %310 = vdwg.mxu0
    %311 = vmatpush.msra.mxu0 %v262
    %312 = vmatpush.msra.mxu0 %v258
    %313 = vmatpush.msra.mxu0 %v254
    %314 = vmatpush.msra.mxu0 %v250
    %315 = vmatpush.msra.mxu0 %v246
    %316 = vmatpush.msra.mxu0 %v242
    %317 = vmatpush.msra.mxu0 %v238
    %318 = vmatpush.msra.mxu0 %v234
    %319 = vmatpush.msra.mxu0 %v230
    %320 = vmatpush.msra.mxu0 %v226
    %321 = vmatpush.msra.mxu0 %v222
    %322 = vmatpush.msra.mxu0 %v218
    %323 = vmatpush.msra.mxu0 %v214
    %324 = vmatpush.msra.mxu0 %v210
    %325 = vmatpush.msra.mxu0 %v206
    %326 = vmatpush.msra.mxu0 %v202
    %327 = vmatmul.f32.gmra.mxu0 0.0
    %v328 = vpop.f32.mrf.mxu0
    %v329 = vadd.f32 0.0, %v328
    %330 = vdwg.mxu0
    %331 = vmatpush.msra.mxu0 %v263
    %332 = vmatpush.msra.mxu0 %v259
    %333 = vmatpush.msra.mxu0 %v255
    %334 = vmatpush.msra.mxu0 %v251
    %335 = vmatpush.msra.mxu0 %v247
    %336 = vmatpush.msra.mxu0 %v243
    %337 = vmatpush.msra.mxu0 %v239
    %338 = vmatpush.msra.mxu0 %v235
    %339 = vmatpush.msra.mxu0 %v231
    %340 = vmatpush.msra.mxu0 %v227
    %341 = vmatpush.msra.mxu0 %v223
    %342 = vmatpush.msra.mxu0 %v219
    %343 = vmatpush.msra.mxu0 %v215
    %344 = vmatpush.msra.mxu0 %v211
    %345 = vmatpush.msra.mxu0 %v207
    %346 = vmatpush.msra.mxu0 %v203
    %347 = vmatmul.f32.gmra.mxu0 0.0
    %v348 = vpop.f32.mrf.mxu0
    %v349 = vadd.f32 0.0, %v348
    %350 = vdwg.mxu0
    %v351 = vadd.f32 %v267, %v289
    %v352 = vadd.f32 %v268, %v309
    %v353 = vadd.f32 %v269, %v329
    %v354 = vadd.f32 %v270, %v349
    %v355 = vxor.u32 %v351, 2147483648
    %v356 = vxor.u32 %v352, 2147483648
    %v357 = vmul.f32 %v355, 1.442695
    %v358 = vpow.pop %v357
    %v359 = vmul.f32 %v356, 1.442695
    %v360 = vpow.pop %v359
    %v361 = vadd.f32 %v358, 1.0
    %v362 = vadd.f32 %v360, 1.0
    %v363 = vrcp.pop %v361
    %v364 = vmul.f32 %v361, %v363
    %v365 = vsub.f32 1.0, %v364
    %v366 = vmul.f32 %v363, %v365
    %v367 = vadd.f32 %v363, %v366
    %vm368 = vweird.f32 %v361
    %vm369 = vweird.f32 %v363
    %vm370 = vmor %vm368, %vm369
    %v371 = vsel %vm370, %v363, %v367
    %v372 = vand.u32 2147483647, %v361
    %vm373 = vcmp.eq.f32.partialorder %v372, 8.507059e+37
    %v374 = vand.u32 %v361, 2147483648
    %v375 = vor.u32 1.1754944e-38, %v374
    %v376 = vsel %vm373, %v375, %v371
    %v377 = vmul.f32 1.0, %v376
    %v378 = vrcp.pop %v362
    %v379 = vmul.f32 %v362, %v378
    %v380 = vsub.f32 1.0, %v379
    %v381 = vmul.f32 %v378, %v380
    %v382 = vadd.f32 %v378, %v381
    %vm383 = vweird.f32 %v362
    %vm384 = vweird.f32 %v378
    %vm385 = vmor %vm383, %vm384
    %v386 = vsel %vm385, %v378, %v382
    %v387 = vand.u32 2147483647, %v362
    %vm388 = vcmp.eq.f32.partialorder %v387, 8.507059e+37
    %v389 = vand.u32 %v362, 2147483648
    %v390 = vor.u32 1.1754944e-38, %v389
    %v391 = vsel %vm388, %v390, %v386
    %v392 = vmul.f32 1.0, %v391
    %v393 = vtanh.pop %v353
    %v394 = vxor.u32 %v354, 2147483648
    %v395 = vmul.f32 %v394, 1.442695
    %v396 = vpow.pop %v395
    %v397 = vadd.f32 %v396, 1.0
    %v398 = vrcp.pop %v397
    %v399 = vmul.f32 %v397, %v398
    %v400 = vsub.f32 1.0, %v399
    %v401 = vmul.f32 %v398, %v400
    %v402 = vadd.f32 %v398, %v401
    %vm403 = vweird.f32 %v397
    %vm404 = vweird.f32 %v398
    %vm405 = vmor %vm403, %vm404
    %v406 = vsel %vm405, %v398, %v402
    %v407 = vand.u32 2147483647, %v397
    %vm408 = vcmp.eq.f32.partialorder %v407, 8.507059e+37
    %v409 = vand.u32 %v397, 2147483648
    %v410 = vor.u32 1.1754944e-38, %v409
    %v411 = vsel %vm408, %v410, %v406
    %v412 = vmul.f32 1.0, %v411
    %v413 = vmul.f32 %v392, 0.0
    %v414 = vmul.f32 %v377, %v393
    %v415 = vadd.f32 %v413, %v414
    %v416 = vtanh.pop %v415
    %v417 = vmul.f32 %v412, %v416
    %s418 = smul.u32 1, 4
    %s419 = smul.addr %s418, 8
    %s420 = scalar_lea.vmem [#allocation2], %s419
    %v421 = vld [vmem:[%s420] sm:$0xff]
    %v422 = vld [vmem:[%s420 + $0x8] sm:$0xff]
    %v423 = vld [vmem:[%s420 + $0x10] sm:$0xff]
    %v424 = vld [vmem:[%s420 + $0x18] sm:$0xff]
    %425 = vmatpush.msra.mxu0 %v260
    %426 = vmatpush.msra.mxu0 %v256
    %427 = vmatpush.msra.mxu0 %v252
    %428 = vmatpush.msra.mxu0 %v248
    %429 = vmatpush.msra.mxu0 %v244
    %430 = vmatpush.msra.mxu0 %v240
    %431 = vmatpush.msra.mxu0 %v236
    %432 = vmatpush.msra.mxu0 %v232
    %433 = vmatpush.msra.mxu0 %v228
    %434 = vmatpush.msra.mxu0 %v224
    %435 = vmatpush.msra.mxu0 %v220
    %436 = vmatpush.msra.mxu0 %v216
    %437 = vmatpush.msra.mxu0 %v212
    %438 = vmatpush.msra.mxu0 %v208
    %439 = vmatpush.msra.mxu0 %v204
    %440 = vmatpush.msra.mxu0 %v200
    %441 = vmatmul.f32.gmra.mxu0 %v417
    %v442 = vpop.f32.mrf.mxu0
    %v443 = vadd.f32 0.0, %v442
    %444 = vdwg.mxu0
    %445 = vmatpush.msra.mxu0 %v261
    %446 = vmatpush.msra.mxu0 %v257
    %447 = vmatpush.msra.mxu0 %v253
    %448 = vmatpush.msra.mxu0 %v249
    %449 = vmatpush.msra.mxu0 %v245
    %450 = vmatpush.msra.mxu0 %v241
    %451 = vmatpush.msra.mxu0 %v237
    %452 = vmatpush.msra.mxu0 %v233
    %453 = vmatpush.msra.mxu0 %v229
    %454 = vmatpush.msra.mxu0 %v225
    %455 = vmatpush.msra.mxu0 %v221
    %456 = vmatpush.msra.mxu0 %v217
    %457 = vmatpush.msra.mxu0 %v213
    %458 = vmatpush.msra.mxu0 %v209
    %459 = vmatpush.msra.mxu0 %v205
    %460 = vmatpush.msra.mxu0 %v201
    %461 = vmatmul.f32.gmra.mxu0 %v417
    %v462 = vpop.f32.mrf.mxu0
    %v463 = vadd.f32 0.0, %v462
    %464 = vdwg.mxu0
    %465 = vmatpush.msra.mxu0 %v262
    %466 = vmatpush.msra.mxu0 %v258
    %467 = vmatpush.msra.mxu0 %v254
    %468 = vmatpush.msra.mxu0 %v250
    %469 = vmatpush.msra.mxu0 %v246
    %470 = vmatpush.msra.mxu0 %v242
    %471 = vmatpush.msra.mxu0 %v238
    %472 = vmatpush.msra.mxu0 %v234
    %473 = vmatpush.msra.mxu0 %v230
    %474 = vmatpush.msra.mxu0 %v226
    %475 = vmatpush.msra.mxu0 %v222
    %476 = vmatpush.msra.mxu0 %v218
    %477 = vmatpush.msra.mxu0 %v214
    %478 = vmatpush.msra.mxu0 %v210
    %479 = vmatpush.msra.mxu0 %v206
    %480 = vmatpush.msra.mxu0 %v202
    %481 = vmatmul.f32.gmra.mxu0 %v417
    %v482 = vpop.f32.mrf.mxu0
    %v483 = vadd.f32 0.0, %v482
    %484 = vdwg.mxu0
    %485 = vmatpush.msra.mxu0 %v263
    %486 = vmatpush.msra.mxu0 %v259
    %487 = vmatpush.msra.mxu0 %v255
    %488 = vmatpush.msra.mxu0 %v251
    %489 = vmatpush.msra.mxu0 %v247
    %490 = vmatpush.msra.mxu0 %v243
    %491 = vmatpush.msra.mxu0 %v239
    %492 = vmatpush.msra.mxu0 %v235
    %493 = vmatpush.msra.mxu0 %v231
    %494 = vmatpush.msra.mxu0 %v227
    %495 = vmatpush.msra.mxu0 %v223
    %496 = vmatpush.msra.mxu0 %v219
    %497 = vmatpush.msra.mxu0 %v215
    %498 = vmatpush.msra.mxu0 %v211
    %499 = vmatpush.msra.mxu0 %v207
    %500 = vmatpush.msra.mxu0 %v203
    %501 = vmatmul.f32.gmra.mxu0 %v417
    %v502 = vpop.f32.mrf.mxu0
    %v503 = vadd.f32 0.0, %v502
    %504 = vdwg.mxu0
    %v505 = vadd.f32 %v421, %v443
    %v506 = vadd.f32 %v422, %v463
    %v507 = vadd.f32 %v423, %v483
    %v508 = vadd.f32 %v424, %v503
    %v509 = vxor.u32 %v505, 2147483648
    %v510 = vxor.u32 %v506, 2147483648
    %v511 = vmul.f32 %v509, 1.442695
    %v512 = vpow.pop %v511
    %v513 = vmul.f32 %v510, 1.442695
    %v514 = vpow.pop %v513
    %v515 = vadd.f32 %v512, 1.0
    %v516 = vadd.f32 %v514, 1.0
    %v517 = vrcp.pop %v515
    %v518 = vmul.f32 %v515, %v517
    %v519 = vsub.f32 1.0, %v518
    %v520 = vmul.f32 %v517, %v519
    %v521 = vadd.f32 %v517, %v520
    %vm522 = vweird.f32 %v515
    %vm523 = vweird.f32 %v517
    %vm524 = vmor %vm522, %vm523
    %v525 = vsel %vm524, %v517, %v521
    %v526 = vand.u32 2147483647, %v515
    %vm527 = vcmp.eq.f32.partialorder %v526, 8.507059e+37
    %v528 = vand.u32 %v515, 2147483648
    %v529 = vor.u32 1.1754944e-38, %v528
    %v530 = vsel %vm527, %v529, %v525
    %v531 = vmul.f32 1.0, %v530
    %v532 = vrcp.pop %v516
    %v533 = vmul.f32 %v516, %v532
    %v534 = vsub.f32 1.0, %v533
    %v535 = vmul.f32 %v532, %v534
    %v536 = vadd.f32 %v532, %v535
    %vm537 = vweird.f32 %v516
    %vm538 = vweird.f32 %v532
    %vm539 = vmor %vm537, %vm538
    %v540 = vsel %vm539, %v532, %v536
    %v541 = vand.u32 2147483647, %v516
    %vm542 = vcmp.eq.f32.partialorder %v541, 8.507059e+37
    %v543 = vand.u32 %v516, 2147483648
    %v544 = vor.u32 1.1754944e-38, %v543
    %v545 = vsel %vm542, %v544, %v540
    %v546 = vmul.f32 1.0, %v545
    %v547 = vtanh.pop %v507
    %v548 = vxor.u32 %v508, 2147483648
    %v549 = vmul.f32 %v548, 1.442695
    %v550 = vpow.pop %v549
    %v551 = vadd.f32 %v550, 1.0
    %v552 = vrcp.pop %v551
    %v553 = vmul.f32 %v551, %v552
    %v554 = vsub.f32 1.0, %v553
    %v555 = vmul.f32 %v552, %v554
    %v556 = vadd.f32 %v552, %v555
    %vm557 = vweird.f32 %v551
    %vm558 = vweird.f32 %v552
    %vm559 = vmor %vm557, %vm558
    %v560 = vsel %vm559, %v552, %v556
    %v561 = vand.u32 2147483647, %v551
    %vm562 = vcmp.eq.f32.partialorder %v561, 8.507059e+37
    %v563 = vand.u32 %v551, 2147483648
    %v564 = vor.u32 1.1754944e-38, %v563
    %v565 = vsel %vm562, %v564, %v560
    %v566 = vmul.f32 1.0, %v565
    %v567 = vmul.f32 %v546, %v415
    %v568 = vmul.f32 %v531, %v547
    %v569 = vadd.f32 %v567, %v568
    %v570 = vtanh.pop %v569
    %v571 = vmul.f32 %v566, %v570
    %s572 = smul.u32 2, 4
    %s573 = smul.addr %s572, 8
    %s574 = scalar_lea.vmem [#allocation2], %s573
    %v575 = vld [vmem:[%s574] sm:$0xff]
    %v576 = vld [vmem:[%s574 + $0x8] sm:$0xff]
    %v577 = vld [vmem:[%s574 + $0x10] sm:$0xff]
    %v578 = vld [vmem:[%s574 + $0x18] sm:$0xff]
    %579 = vmatpush.msra.mxu0 %v260
    %580 = vmatpush.msra.mxu0 %v256
    %581 = vmatpush.msra.mxu0 %v252
    %582 = vmatpush.msra.mxu0 %v248
    %583 = vmatpush.msra.mxu0 %v244
    %584 = vmatpush.msra.mxu0 %v240
    %585 = vmatpush.msra.mxu0 %v236
    %586 = vmatpush.msra.mxu0 %v232
    %587 = vmatpush.msra.mxu0 %v228
    %588 = vmatpush.msra.mxu0 %v224
    %589 = vmatpush.msra.mxu0 %v220
    %590 = vmatpush.msra.mxu0 %v216
    %591 = vmatpush.msra.mxu0 %v212
    %592 = vmatpush.msra.mxu0 %v208
    %593 = vmatpush.msra.mxu0 %v204
    %594 = vmatpush.msra.mxu0 %v200
    %595 = vmatmul.f32.gmra.mxu0 %v571
    %v596 = vpop.f32.mrf.mxu0
    %v597 = vadd.f32 0.0, %v596
    %598 = vdwg.mxu0
    %599 = vmatpush.msra.mxu0 %v261
    %600 = vmatpush.msra.mxu0 %v257
    %601 = vmatpush.msra.mxu0 %v253
    %602 = vmatpush.msra.mxu0 %v249
    %603 = vmatpush.msra.mxu0 %v245
    %604 = vmatpush.msra.mxu0 %v241
    %605 = vmatpush.msra.mxu0 %v237
    %606 = vmatpush.msra.mxu0 %v233
    %607 = vmatpush.msra.mxu0 %v229
    %608 = vmatpush.msra.mxu0 %v225
    %609 = vmatpush.msra.mxu0 %v221
    %610 = vmatpush.msra.mxu0 %v217
    %611 = vmatpush.msra.mxu0 %v213
    %612 = vmatpush.msra.mxu0 %v209
    %613 = vmatpush.msra.mxu0 %v205
    %614 = vmatpush.msra.mxu0 %v201
    %615 = vmatmul.f32.gmra.mxu0 %v571
    %v616 = vpop.f32.mrf.mxu0
    %v617 = vadd.f32 0.0, %v616
    %618 = vdwg.mxu0
    %619 = vmatpush.msra.mxu0 %v262
    %620 = vmatpush.msra.mxu0 %v258
    %621 = vmatpush.msra.mxu0 %v254
    %622 = vmatpush.msra.mxu0 %v250
    %623 = vmatpush.msra.mxu0 %v246
    %624 = vmatpush.msra.mxu0 %v242
    %625 = vmatpush.msra.mxu0 %v238
    %626 = vmatpush.msra.mxu0 %v234
    %627 = vmatpush.msra.mxu0 %v230
    %628 = vmatpush.msra.mxu0 %v226
    %629 = vmatpush.msra.mxu0 %v222
    %630 = vmatpush.msra.mxu0 %v218
    %631 = vmatpush.msra.mxu0 %v214
    %632 = vmatpush.msra.mxu0 %v210
    %633 = vmatpush.msra.mxu0 %v206
    %634 = vmatpush.msra.mxu0 %v202
    %635 = vmatmul.f32.gmra.mxu0 %v571
    %v636 = vpop.f32.mrf.mxu0
    %v637 = vadd.f32 0.0, %v636
    %638 = vdwg.mxu0
    %639 = vmatpush.msra.mxu0 %v263
    %640 = vmatpush.msra.mxu0 %v259
    %641 = vmatpush.msra.mxu0 %v255
    %642 = vmatpush.msra.mxu0 %v251
    %643 = vmatpush.msra.mxu0 %v247
    %644 = vmatpush.msra.mxu0 %v243
    %645 = vmatpush.msra.mxu0 %v239
    %646 = vmatpush.msra.mxu0 %v235
    %647 = vmatpush.msra.mxu0 %v231
    %648 = vmatpush.msra.mxu0 %v227
    %649 = vmatpush.msra.mxu0 %v223
    %650 = vmatpush.msra.mxu0 %v219
    %651 = vmatpush.msra.mxu0 %v215
    %652 = vmatpush.msra.mxu0 %v211
    %653 = vmatpush.msra.mxu0 %v207
    %654 = vmatpush.msra.mxu0 %v203
    %655 = vmatmul.f32.gmra.mxu0 %v571
    %v656 = vpop.f32.mrf.mxu0
    %v657 = vadd.f32 0.0, %v656
    %658 = vdwg.mxu0
    %v659 = vadd.f32 %v575, %v597
    %v660 = vadd.f32 %v576, %v617
    %v661 = vadd.f32 %v577, %v637
    %v662 = vadd.f32 %v578, %v657
    %v663 = vxor.u32 %v659, 2147483648
    %v664 = vxor.u32 %v660, 2147483648
    %v665 = vmul.f32 %v663, 1.442695
    %v666 = vpow.pop %v665
    %v667 = vmul.f32 %v664, 1.442695
    %v668 = vpow.pop %v667
    %v669 = vadd.f32 %v666, 1.0
    %v670 = vadd.f32 %v668, 1.0
    %v671 = vrcp.pop %v669
    %v672 = vmul.f32 %v669, %v671
    %v673 = vsub.f32 1.0, %v672
    %v674 = vmul.f32 %v671, %v673
    %v675 = vadd.f32 %v671, %v674
    %vm676 = vweird.f32 %v669
    %vm677 = vweird.f32 %v671
    %vm678 = vmor %vm676, %vm677
    %v679 = vsel %vm678, %v671, %v675
    %v680 = vand.u32 2147483647, %v669
    %vm681 = vcmp.eq.f32.partialorder %v680, 8.507059e+37
    %v682 = vand.u32 %v669, 2147483648
    %v683 = vor.u32 1.1754944e-38, %v682
    %v684 = vsel %vm681, %v683, %v679
    %v685 = vmul.f32 1.0, %v684
    %v686 = vrcp.pop %v670
    %v687 = vmul.f32 %v670, %v686
    %v688 = vsub.f32 1.0, %v687
    %v689 = vmul.f32 %v686, %v688
    %v690 = vadd.f32 %v686, %v689
    %vm691 = vweird.f32 %v670
    %vm692 = vweird.f32 %v686
    %vm693 = vmor %vm691, %vm692
    %v694 = vsel %vm693, %v686, %v690
    %v695 = vand.u32 2147483647, %v670
    %vm696 = vcmp.eq.f32.partialorder %v695, 8.507059e+37
    %v697 = vand.u32 %v670, 2147483648
    %v698 = vor.u32 1.1754944e-38, %v697
    %v699 = vsel %vm696, %v698, %v694
    %v700 = vmul.f32 1.0, %v699
    %v701 = vtanh.pop %v661
    %v702 = vxor.u32 %v662, 2147483648
    %v703 = vmul.f32 %v702, 1.442695
    %v704 = vpow.pop %v703
    %v705 = vadd.f32 %v704, 1.0
    %v706 = vrcp.pop %v705
    %v707 = vmul.f32 %v705, %v706
    %v708 = vsub.f32 1.0, %v707
    %v709 = vmul.f32 %v706, %v708
    %v710 = vadd.f32 %v706, %v709
    %vm711 = vweird.f32 %v705
    %vm712 = vweird.f32 %v706
    %vm713 = vmor %vm711, %vm712
    %v714 = vsel %vm713, %v706, %v710
    %v715 = vand.u32 2147483647, %v705
    %vm716 = vcmp.eq.f32.partialorder %v715, 8.507059e+37
    %v717 = vand.u32 %v705, 2147483648
    %v718 = vor.u32 1.1754944e-38, %v717
    %v719 = vsel %vm716, %v718, %v714
    %v720 = vmul.f32 1.0, %v719
    %v721 = vmul.f32 %v700, %v569
    %v722 = vmul.f32 %v685, %v701
    %v723 = vadd.f32 %v721, %v722
    %v724 = vtanh.pop %v723
    %v725 = vmul.f32 %v720, %v724
    %s726 = smul.u32 3, 4
    %s727 = smul.addr %s726, 8
    %s728 = scalar_lea.vmem [#allocation2], %s727
    %v729 = vld [vmem:[%s728] sm:$0xff]
    %v730 = vld [vmem:[%s728 + $0x8] sm:$0xff]
    %v731 = vld [vmem:[%s728 + $0x10] sm:$0xff]
    %v732 = vld [vmem:[%s728 + $0x18] sm:$0xff]
    %733 = vmatpush.msra.mxu0 %v260
    %734 = vmatpush.msra.mxu0 %v256
    %735 = vmatpush.msra.mxu0 %v252
    %736 = vmatpush.msra.mxu0 %v248
    %737 = vmatpush.msra.mxu0 %v244
    %738 = vmatpush.msra.mxu0 %v240
    %739 = vmatpush.msra.mxu0 %v236
    %740 = vmatpush.msra.mxu0 %v232
    %741 = vmatpush.msra.mxu0 %v228
    %742 = vmatpush.msra.mxu0 %v224
    %743 = vmatpush.msra.mxu0 %v220
    %744 = vmatpush.msra.mxu0 %v216
    %745 = vmatpush.msra.mxu0 %v212
    %746 = vmatpush.msra.mxu0 %v208
    %747 = vmatpush.msra.mxu0 %v204
    %748 = vmatpush.msra.mxu0 %v200
    %749 = vmatmul.f32.gmra.mxu0 %v725
    %v750 = vpop.f32.mrf.mxu0
    %v751 = vadd.f32 0.0, %v750
    %752 = vdwg.mxu0
    %753 = vmatpush.msra.mxu0 %v261
    %754 = vmatpush.msra.mxu0 %v257
    %755 = vmatpush.msra.mxu0 %v253
    %756 = vmatpush.msra.mxu0 %v249
    %757 = vmatpush.msra.mxu0 %v245
    %758 = vmatpush.msra.mxu0 %v241
    %759 = vmatpush.msra.mxu0 %v237
    %760 = vmatpush.msra.mxu0 %v233
    %761 = vmatpush.msra.mxu0 %v229
    %762 = vmatpush.msra.mxu0 %v225
    %763 = vmatpush.msra.mxu0 %v221
    %764 = vmatpush.msra.mxu0 %v217
    %765 = vmatpush.msra.mxu0 %v213
    %766 = vmatpush.msra.mxu0 %v209
    %767 = vmatpush.msra.mxu0 %v205
    %768 = vmatpush.msra.mxu0 %v201
    %769 = vmatmul.f32.gmra.mxu0 %v725
    %v770 = vpop.f32.mrf.mxu0
    %v771 = vadd.f32 0.0, %v770
    %772 = vdwg.mxu0
    %773 = vmatpush.msra.mxu0 %v262
    %774 = vmatpush.msra.mxu0 %v258
    %775 = vmatpush.msra.mxu0 %v254
    %776 = vmatpush.msra.mxu0 %v250
    %777 = vmatpush.msra.mxu0 %v246
    %778 = vmatpush.msra.mxu0 %v242
    %779 = vmatpush.msra.mxu0 %v238
    %780 = vmatpush.msra.mxu0 %v234
    %781 = vmatpush.msra.mxu0 %v230
    %782 = vmatpush.msra.mxu0 %v226
    %783 = vmatpush.msra.mxu0 %v222
    %784 = vmatpush.msra.mxu0 %v218
    %785 = vmatpush.msra.mxu0 %v214
    %786 = vmatpush.msra.mxu0 %v210
    %787 = vmatpush.msra.mxu0 %v206
    %788 = vmatpush.msra.mxu0 %v202
    %789 = vmatmul.f32.gmra.mxu0 %v725
    %v790 = vpop.f32.mrf.mxu0
    %v791 = vadd.f32 0.0, %v790
    %792 = vdwg.mxu0
    %793 = vmatpush.msra.mxu0 %v263
    %794 = vmatpush.msra.mxu0 %v259
    %795 = vmatpush.msra.mxu0 %v255
    %796 = vmatpush.msra.mxu0 %v251
    %797 = vmatpush.msra.mxu0 %v247
    %798 = vmatpush.msra.mxu0 %v243
    %799 = vmatpush.msra.mxu0 %v239
    %800 = vmatpush.msra.mxu0 %v235
    %801 = vmatpush.msra.mxu0 %v231
    %802 = vmatpush.msra.mxu0 %v227
    %803 = vmatpush.msra.mxu0 %v223
    %804 = vmatpush.msra.mxu0 %v219
    %805 = vmatpush.msra.mxu0 %v215
    %806 = vmatpush.msra.mxu0 %v211
    %807 = vmatpush.msra.mxu0 %v207
    %808 = vmatpush.msra.mxu0 %v203
    %809 = vmatmul.f32.gmra.mxu0 %v725
    %v810 = vpop.f32.mrf.mxu0
    %v811 = vadd.f32 0.0, %v810
    %812 = vdwg.mxu0
    %v813 = vadd.f32 %v729, %v751
    %v814 = vadd.f32 %v730, %v771
    %v815 = vadd.f32 %v731, %v791
    %v816 = vadd.f32 %v732, %v811
    %v817 = vxor.u32 %v813, 2147483648
    %v818 = vxor.u32 %v814, 2147483648
    %v819 = vmul.f32 %v817, 1.442695
    %v820 = vpow.pop %v819
    %v821 = vmul.f32 %v818, 1.442695
    %v822 = vpow.pop %v821
    %v823 = vadd.f32 %v820, 1.0
    %v824 = vadd.f32 %v822, 1.0
    %v825 = vrcp.pop %v823
    %v826 = vmul.f32 %v823, %v825
    %v827 = vsub.f32 1.0, %v826
    %v828 = vmul.f32 %v825, %v827
    %v829 = vadd.f32 %v825, %v828
    %vm830 = vweird.f32 %v823
    %vm831 = vweird.f32 %v825
    %vm832 = vmor %vm830, %vm831
    %v833 = vsel %vm832, %v825, %v829
    %v834 = vand.u32 2147483647, %v823
    %vm835 = vcmp.eq.f32.partialorder %v834, 8.507059e+37
    %v836 = vand.u32 %v823, 2147483648
    %v837 = vor.u32 1.1754944e-38, %v836
    %v838 = vsel %vm835, %v837, %v833
    %v839 = vmul.f32 1.0, %v838
    %v840 = vrcp.pop %v824
    %v841 = vmul.f32 %v824, %v840
    %v842 = vsub.f32 1.0, %v841
    %v843 = vmul.f32 %v840, %v842
    %v844 = vadd.f32 %v840, %v843
    %vm845 = vweird.f32 %v824
    %vm846 = vweird.f32 %v840
    %vm847 = vmor %vm845, %vm846
    %v848 = vsel %vm847, %v840, %v844
    %v849 = vand.u32 2147483647, %v824
    %vm850 = vcmp.eq.f32.partialorder %v849, 8.507059e+37
    %v851 = vand.u32 %v824, 2147483648
    %v852 = vor.u32 1.1754944e-38, %v851
    %v853 = vsel %vm850, %v852, %v848
    %v854 = vmul.f32 1.0, %v853
    %v855 = vtanh.pop %v815
    %v856 = vxor.u32 %v816, 2147483648
    %v857 = vmul.f32 %v856, 1.442695
    %v858 = vpow.pop %v857
    %v859 = vadd.f32 %v858, 1.0
    %v860 = vrcp.pop %v859
    %v861 = vmul.f32 %v859, %v860
    %v862 = vsub.f32 1.0, %v861
    %v863 = vmul.f32 %v860, %v862
    %v864 = vadd.f32 %v860, %v863
    %vm865 = vweird.f32 %v859
    %vm866 = vweird.f32 %v860
    %vm867 = vmor %vm865, %vm866
    %v868 = vsel %vm867, %v860, %v864
    %v869 = vand.u32 2147483647, %v859
    %vm870 = vcmp.eq.f32.partialorder %v869, 8.507059e+37
    %v871 = vand.u32 %v859, 2147483648
    %v872 = vor.u32 1.1754944e-38, %v871
    %v873 = vsel %vm870, %v872, %v868
    %v874 = vmul.f32 1.0, %v873
    %v875 = vmul.f32 %v854, %v723
    %v876 = vmul.f32 %v839, %v855
    %v877 = vadd.f32 %v875, %v876
    %v878 = vtanh.pop %v877
    %v879 = vmul.f32 %v874, %v878
    %880 = vst [vmem:[#allocation6] sm:$0xff] %v879
    %881 = vst [vmem:[#allocation7] sm:$0xff] %v877
    // Predicated region
    $region22: #{tpu_custom_call.1} parent=1 // pred_check
      _
    $region23: #{tpu_custom_call.1} parent=1 // pred_check_branch
      %883 = sbr.rel (0) target = $region25
    $region24: #{tpu_custom_call.1} parent=1 // pred_region
      %885 = vsyncadd [#allocation5], 0
      %s887 = sshll.u32 [#allocation6], 4
      %s888 = int_to_ptr.vmem [resolvable:$true] %s887
      %s889 = sshll.u32 %s4, 4
      %s890 = int_to_ptr.hbm [resolvable:$true] %s889
      %892 = dma.vmem_to_hbm [thread:$0]  %s888, 128, %s890, [#allocation5]
    $region25: #{tpu_custom_call.1} parent=1 // pred_fallthru
      _
    // Predicated region
    $region26: #{tpu_custom_call.1} parent=1 // pred_check
      _
    $region27: #{tpu_custom_call.1} parent=1 // pred_check_branch
      %894 = sbr.rel (0) target = $region29
    $region28: #{tpu_custom_call.1} parent=1 // pred_region
      %896 = vsyncadd [#allocation8], 0
      %s898 = sshll.u32 [#allocation7], 4
      %s899 = int_to_ptr.vmem [resolvable:$true] %s898
      %s900 = sshll.u32 %s5, 4
      %s901 = int_to_ptr.hbm [resolvable:$true] %s900
      %903 = dma.vmem_to_hbm [thread:$0]  %s899, 128, %s901, [#allocation8]
    $region29: #{tpu_custom_call.1} parent=1 // pred_fallthru
      _
    // Predicated region
    $region30: #{tpu_custom_call.1} parent=1 // pred_check
      _
    $region31: #{tpu_custom_call.1} parent=1 // pred_check_branch
      %905 = sbr.rel (0) target = $region33
    $region32: #{tpu_custom_call.1} parent=1 // pred_region
      %907 = dma.done [#allocation5], 128
    $region33: #{tpu_custom_call.1} parent=1 // pred_fallthru
      _
    // Predicated region
    $region34: #{tpu_custom_call.1} parent=1 // pred_check
      _
    $region35: #{tpu_custom_call.1} parent=1 // pred_check_branch
      %909 = sbr.rel (0) target = $region37
    $region36: #{tpu_custom_call.1} parent=1 // pred_region
      %911 = dma.done [#allocation8], 128
    $region37: #{tpu_custom_call.1} parent=1 // pred_fallthru
      _
    %912 = vsyncpa [#allocation4], 1
    %913 = vsyncpa [#allocation5], 1
    %914 = vsyncpa [#allocation8], 1

</llo_original>
